<compile_context>
chip_gen: v5e
topology: v5e:2x2
jax: 0.10.0
libtpu: 0.0.40
codegen_flags: <defaults>
</compile_context>

<pallas_src>
import functools
import math

import jax
import jax.numpy as jnp
from jax.experimental import pallas as pl
from jax.experimental.pallas import tpu as pltpu


# ----------------------------------------------------------------------------- helpers
def _round_up(x: int, m: int) -> int:
    return ((x + m - 1) // m) * m


def _sublane(dtype) -> int:
    # sublane tile for full (unmasked) vreg loads/stores: 8 for 4B, 16 for 2B, 32 for 1B
    return {4: 8, 2: 16, 1: 32}.get(jnp.dtype(dtype).itemsize, 8)


def _vmem_capacity_bytes() -> int:
    try:
        info = pltpu.get_tpu_info()
        cap = getattr(info, "vmem_capacity_bytes", None)
        if cap:
            return int(cap)
    except Exception:
        pass
    return 64 * 1024 * 1024  # conservative fallback (v7x physical VMEM)


def _vmem_limit_bytes() -> int:
    # raise the scoped-VMEM limit (v5e default is only 16 MiB) but stay well
    # under the physical capacity of the current chip generation.
    return int(min(_vmem_capacity_bytes() * 3 // 4, 96 * 1024 * 1024))


# ----------------------------------------------------------------------------- RMSNorm
def _rmsnorm_kernel(x_ref, w_ref, o_ref, *, eps: float):
    # x_ref: (block_rows, dim), w_ref: (1, dim), o_ref: (block_rows, dim)
    x = x_ref[...].astype(jnp.float32)
    ms = jnp.mean(x * x, axis=-1, keepdims=True)
    normed = x * jax.lax.rsqrt(ms + eps)
    # match torch: _norm(x.float()).type_as(x) * weight
    normed = normed.astype(x_ref.dtype)
    o_ref[...] = (normed * w_ref[...]).astype(o_ref.dtype)


def rmsnorm(x: jax.Array, weight: jax.Array, eps: float = 1e-6,
            block_rows: int | None = None) -> jax.Array:
    """RMSNorm over the last axis of `x`, scaled by `weight` (shape [dim])."""
    dim = x.shape[-1]
    assert weight.shape == (dim,)

    orig_shape = x.shape
    rows = int(math.prod(orig_shape[:-1])) if len(orig_shape) > 1 else 1
    x2d = x.reshape(rows, dim)
    w2d = weight.reshape(1, dim)

    # torch: normed.type_as(x) * weight -> ordinary dtype promotion
    out_dtype = jnp.promote_types(x.dtype, weight.dtype)
    in_bytes = jnp.dtype(x.dtype).itemsize
    out_bytes = jnp.dtype(out_dtype).itemsize

    # --- tile selection: big, sublane-aligned blocks sized to the VMEM budget
    sub = _sublane(x.dtype)
    rows_sub = _round_up(rows, sub)
    if block_rows is None:
        block_budget = min(_vmem_capacity_bytes() // 8, 8 * 1024 * 1024)  # 2-8 MiB regime
        # double-buffered input + output, plus f32 intermediates
        per_row = dim * (2 * in_bytes + 2 * out_bytes + 2 * 4)
        block_rows = max(sub, min(1024, block_budget // max(per_row, 1)))
    block_rows = max(sub, (block_rows // sub) * sub)
    block_rows = min(block_rows, rows_sub)
    # keep >= 2 grid steps when possible (v7x: 2 TensorCores share the grid)
    if block_rows >= rows_sub and rows_sub > sub:
        block_rows = _round_up(pl.cdiv(rows_sub, 2), sub)

    rows_pad = _round_up(rows, block_rows)
    if rows_pad != rows:
        x2d = jnp.pad(x2d, ((0, rows_pad - rows), (0, 0)))
    grid = (rows_pad // block_rows,)

    out = pl.pallas_call(
        functools.partial(_rmsnorm_kernel, eps=eps),
        out_shape=jax.ShapeDtypeStruct((rows_pad, dim), out_dtype),
        grid_spec=pltpu.PrefetchScalarGridSpec(
            num_scalar_prefetch=0,
            grid=grid,
            in_specs=[
                pl.BlockSpec((block_rows, dim), lambda i: (i, 0)),
                pl.BlockSpec((1, dim), lambda i: (0, 0)),
            ],
            out_specs=pl.BlockSpec((block_rows, dim), lambda i: (i, 0)),
        ),
        compiler_params=pltpu.CompilerParams(
            dimension_semantics=("parallel",),
            vmem_limit_bytes=_vmem_limit_bytes()),
        cost_estimate=pl.CostEstimate(
            flops=3 * rows_pad * dim,
            transcendentals=rows_pad,
            bytes_accessed=rows_pad * dim * (in_bytes + out_bytes) + dim * 4),
    )(x2d, w2d)

    if rows_pad != rows:
        out = out[:rows]
    return out.reshape(orig_shape[:-1] + (dim,))


# ----------------------------------------------------------------------------- matmul (+ fused residual)
def _matmul_kernel(a_ref, b_ref, o_ref, acc_ref):
    @pl.when(pl.program_id(2) == 0)
    def _():
        acc_ref[...] = jnp.zeros_like(acc_ref)

    acc_ref[...] += jnp.dot(a_ref[...], b_ref[...],
                            preferred_element_type=jnp.float32)

    @pl.when(pl.program_id(2) == pl.num_programs(2) - 1)
    def _():
        o_ref[...] = acc_ref[...].astype(o_ref.dtype)


def _matmul_add_kernel(a_ref, b_ref, r_ref, o_ref, acc_ref):
    @pl.when(pl.program_id(2) == 0)
    def _():
        acc_ref[...] = jnp.zeros_like(acc_ref)

    acc_ref[...] += jnp.dot(a_ref[...], b_ref[...],
                            preferred_element_type=jnp.float32)

    @pl.when(pl.program_id(2) == pl.num_programs(2) - 1)
    def _():
        o_ref[...] = (acc_ref[...] + r_ref[...].astype(jnp.float32)).astype(o_ref.dtype)


def matmul(a: jax.Array, b: jax.Array, residual: jax.Array | None = None,
           tm: int | None = None, tn: int | None = None, tk: int | None = None) -> jax.Array:
    """a @ b (+ residual), with zero-padding to tile multiples and MXU tiling."""
    M, K = a.shape
    K2, N = b.shape
    assert K == K2
    out_dtype = jnp.promote_types(a.dtype, b.dtype)

    sub_a = _sublane(a.dtype)
    tm = tm or min(_round_up(M, sub_a), 256)
    tn = tn or min(_round_up(N, 128), 256)
    tk = tk or min(_round_up(K, 128), 512)
    Mp, Np, Kp = _round_up(M, tm), _round_up(N, tn), _round_up(K, tk)

    a_p = jnp.pad(a, ((0, Mp - M), (0, Kp - K))) if (Mp != M or Kp != K) else a
    b_p = jnp.pad(b, ((0, Kp - K), (0, Np - N))) if (Kp != K or Np != N) else b

    in_specs = [
        pl.BlockSpec((tm, tk), lambda i, j, k: (i, k)),
        pl.BlockSpec((tk, tn), lambda i, j, k: (k, j)),
    ]
    inputs = [a_p, b_p]
    if residual is not None:
        r_p = (jnp.pad(residual, ((0, Mp - M), (0, Np - N)))
               if (Mp != M or Np != N) else residual)
        in_specs.append(pl.BlockSpec((tm, tn), lambda i, j, k: (i, j)))
        inputs.append(r_p)
        kernel = _matmul_add_kernel
    else:
        kernel = _matmul_kernel

    out = pl.pallas_call(
        kernel,
        out_shape=jax.ShapeDtypeStruct((Mp, Np), out_dtype),
        grid_spec=pltpu.PrefetchScalarGridSpec(
            num_scalar_prefetch=0,
            grid=(Mp // tm, Np // tn, Kp // tk),
            in_specs=in_specs,
            out_specs=pl.BlockSpec((tm, tn), lambda i, j, k: (i, j)),
            scratch_shapes=[pltpu.VMEM((tm, tn), jnp.float32)]),
        compiler_params=pltpu.CompilerParams(
            dimension_semantics=("parallel", "parallel", "arbitrary"),
            vmem_limit_bytes=_vmem_limit_bytes()),
        cost_estimate=pl.CostEstimate(
            flops=2 * Mp * Np * Kp,
            transcendentals=0,
            bytes_accessed=(Mp * Kp + Kp * Np + Mp * Np) * 4),
    )(*inputs)

    if Mp != M or Np != N:
        out = out[:M, :N]
    return out


# ----------------------------------------------------------------------------- attention core
def _attn_kernel(q_ref, k_ref, v_ref, o_ref, *, scale: float):
    # q_ref: (1, S, D), k_ref/v_ref: (1, KV, D), o_ref: (1, S, D)
    q = q_ref[0].astype(jnp.float32)
    k = k_ref[0].astype(jnp.float32)
    v = v_ref[0]
    # scores = (q k^T) * scale  (contract over head_dim)
    s = jax.lax.dot_general(q, k, (((1,), (1,)), ((), ())),
                            preferred_element_type=jnp.float32) * scale
    m = jnp.max(s, axis=-1, keepdims=True)
    p = jnp.exp(s - m)
    l = jnp.sum(p, axis=-1, keepdims=True)
    p = (p / l).astype(v.dtype)            # softmax in f32, cast back (type_as in torch)
    o = jnp.dot(p, v, preferred_element_type=jnp.float32)
    o_ref[0] = o.astype(o_ref.dtype)


def attention(q: jax.Array, k: jax.Array, v: jax.Array, scale: float) -> jax.Array:
    """q: (BH, S, D), k/v: (BH, KV, D) -> (BH, S, D). Softmax over KV per row."""
    BH, S, D = q.shape
    _, KV, _ = k.shape
    return pl.pallas_call(
        functools.partial(_attn_kernel, scale=scale),
        out_shape=jax.ShapeDtypeStruct((BH, S, D), q.dtype),
        grid_spec=pltpu.PrefetchScalarGridSpec(
            num_scalar_prefetch=0,
            grid=(BH,),
            in_specs=[
                pl.BlockSpec((1, S, D), lambda b: (b, 0, 0)),
                pl.BlockSpec((1, KV, D), lambda b: (b, 0, 0)),
                pl.BlockSpec((1, KV, D), lambda b: (b, 0, 0)),
            ],
            out_specs=pl.BlockSpec((1, S, D), lambda b: (b, 0, 0)),
        ),
        compiler_params=pltpu.CompilerParams(
            dimension_semantics=("parallel",),
            vmem_limit_bytes=_vmem_limit_bytes()),
    )(q, k, v)


# ----------------------------------------------------------------------------- full module forward
def image_cross_atten_forward(x, images, weights, *, n_heads, patch_h, patch_w, eps):
    bsz, seqlen, dim = x.shape
    head_dim = dim // n_heads
    kv_len = patch_h * patch_w
    image_dim = images.shape[-1]
    assert images.shape == (bsz, kv_len, image_dim)

    # norms
    x_norm = rmsnorm(x, weights["norm_w"], eps)
    img_norm = rmsnorm(images, weights["image_norm_w"], eps)

    # projections (weights stored as (in, out))
    xq = matmul(x_norm.reshape(bsz * seqlen, dim), weights["wq"])
    xk = matmul(img_norm.reshape(bsz * kv_len, image_dim), weights["wk"])
    xv = matmul(img_norm.reshape(bsz * kv_len, image_dim), weights["wv"])

    # layout plumbing for per-(batch, head) attention
    q = xq.reshape(bsz, seqlen, n_heads, head_dim).transpose(0, 2, 1, 3)
    k = xk.reshape(bsz, kv_len, n_heads, head_dim).transpose(0, 2, 1, 3)
    v = xv.reshape(bsz, kv_len, n_heads, head_dim).transpose(0, 2, 1, 3)
    q = q.reshape(bsz * n_heads, seqlen, head_dim)
    k = k.reshape(bsz * n_heads, kv_len, head_dim)
    v = v.reshape(bsz * n_heads, kv_len, head_dim)

    attn = attention(q, k, v, 1.0 / math.sqrt(head_dim))
    attn = attn.reshape(bsz, n_heads, seqlen, head_dim).transpose(0, 2, 1, 3)
    attn = attn.reshape(bsz * seqlen, n_heads * head_dim)

    # output projection with fused residual (+ x_norm)
    out = matmul(attn, weights["wo"], residual=x_norm.reshape(bsz * seqlen, dim))
    return out.reshape(bsz, seqlen, dim)


# ----------------------------------------------------------------------------- reference (pure JAX)
def _reference_forward(x, images, w, *, n_heads, eps):
    def rms(t, g):
        tf = t.astype(jnp.float32)
        n = tf * jax.lax.rsqrt(jnp.mean(tf * tf, axis=-1, keepdims=True) + eps)
        return n.astype(t.dtype) * g

    bsz, seqlen, dim = x.shape
    head_dim = dim // n_heads
    kv_len = images.shape[1]
    x_norm = rms(x, w["norm_w"])
    img = rms(images, w["image_norm_w"])
    xq, xk, xv = x_norm @ w["wq"], img @ w["wk"], img @ w["wv"]
    q = xq.reshape(bsz, seqlen, n_heads, head_dim).transpose(0, 2, 1, 3)
    k = xk.reshape(bsz, kv_len, n_heads, head_dim).transpose(0, 2, 1, 3)
    v = xv.reshape(bsz, kv_len, n_heads, head_dim).transpose(0, 2, 1, 3)
    s = jnp.einsum("bhqd,bhkd->bhqk", q, k) / math.sqrt(head_dim)
    p = jax.nn.softmax(s.astype(jnp.float32), axis=-1).astype(q.dtype)
    o = jnp.einsum("bhqk,bhkd->bhqd", p, v)
    o = o.transpose(0, 2, 1, 3).reshape(bsz, seqlen, n_heads * head_dim)
    return o @ w["wo"] + x_norm


# ----------------------------------------------------------------------------- demo / check
if __name__ == "__main__":
    # Small shapes consistent with the module (model-parallel world size = 1):
    dim = 128          # params.dim
    n_heads = 4        # params.c_n_heads
    head_dim = dim // n_heads   # 32
    image_dim = 64     # params.image_dim
    patch_h, patch_w = 4, 4     # kv_len = 16
    bsz, seqlen = 2, 8
    eps = 1e-5         # params.norm_eps

    key = jax.random.PRNGKey(0)
    keys = jax.random.split(key, 6)
    x = jax.random.normal(keys[0], (bsz, seqlen, dim), dtype=jnp.float32)
    images = jax.random.normal(keys[1], (bsz, patch_h * patch_w, image_dim),
                               dtype=jnp.float32)
    weights = {
        "norm_w": jnp.ones((dim,), jnp.float32),          # nn.Parameter(torch.ones(dim))
        "image_norm_w": jnp.ones((image_dim,), jnp.float32),
        "wq": jax.random.normal(keys[2], (dim, n_heads * head_dim), jnp.float32)
              / math.sqrt(dim),
        "wk": jax.random.normal(keys[3], (image_dim, n_heads * head_dim), jnp.float32)
              / math.sqrt(image_dim),
        "wv": jax.random.normal(keys[4], (image_dim, n_heads * head_dim), jnp.float32)
              / math.sqrt(image_dim),
        "wo": jax.random.normal(keys[5], (n_heads * head_dim, dim), jnp.float32)
              / math.sqrt(n_heads * head_dim),
    }

    out = image_cross_atten_forward(x, images, weights, n_heads=n_heads,
                                    patch_h=patch_h, patch_w=patch_w, eps=eps)
    out = jax.block_until_ready(out)

    ref = _reference_forward(x, images, weights, n_heads=n_heads, eps=eps)
    assert out.shape == ref.shape and out.dtype == ref.dtype
    assert bool(jnp.allclose(out, ref, atol=1e-2, rtol=1e-2)), \
        float(jnp.max(jnp.abs(out - ref)))

    print("KERNEL_OK")
</pallas_src>

<mosaic_0001>
module attributes {stable_mosaic.version = 11 : i64} {
  func.func @_rmsnorm_kernel(%arg0: i32, %arg1: memref<8x128xf32, #tpu.memory_space<vmem>>, %arg2: memref<1x128xf32, #tpu.memory_space<vmem>>, %arg3: memref<8x128xf32, #tpu.memory_space<vmem>>) attributes {dimension_semantics = [#tpu.dimension_semantics<parallel>], iteration_bounds = array<i64: 2>, scalar_prefetch = 0 : i64, scratch_operands = 0 : i64, tpu.core_type = #tpu.core_type<tc>, window_params = [{transform_indices = @transform_0, window_bounds = array<i64: 8, 128>}, {pipeline_mode = #tpu.pipeline_mode<synchronous>, transform_indices = @transform_1, window_bounds = array<i64: 1, 128>}, {transform_indices = @transform_2, window_bounds = array<i64: 8, 128>}]} {
    %c0 = arith.constant 0 : index
    %c0_0 = arith.constant 0 : index
    %0 = vector.load %arg1[%c0, %c0_0] : memref<8x128xf32, #tpu.memory_space<vmem>>, vector<8x128xf32>
    %1 = arith.mulf %0, %0 : vector<8x128xf32>
    %cst = arith.constant dense<0.000000e+00> : vector<8xf32>
    %2 = vector.multi_reduction <add>, %1, %cst [1] : vector<8x128xf32> to vector<8xf32>
    %3 = vector.shape_cast %2 : vector<8xf32> to vector<8x1xf32>
    %cst_1 = arith.constant 1.280000e+02 : f32
    %4 = vector.broadcast %cst_1 : f32 to vector<8x1xf32>
    %5 = arith.divf %3, %4 : vector<8x1xf32>
    %cst_2 = arith.constant 9.99999974E-6 : f32
    %6 = vector.broadcast %cst_2 : f32 to vector<8x1xf32>
    %7 = arith.addf %5, %6 : vector<8x1xf32>
    %8 = math.rsqrt %7 : vector<8x1xf32>
    %9 = vector.broadcast %8 : vector<8x1xf32> to vector<8x128xf32>
    %10 = arith.mulf %0, %9 : vector<8x128xf32>
    %c0_3 = arith.constant 0 : index
    %c0_4 = arith.constant 0 : index
    %11 = vector.load %arg2[%c0_3, %c0_4] : memref<1x128xf32, #tpu.memory_space<vmem>>, vector<1x128xf32>
    %12 = vector.broadcast %11 : vector<1x128xf32> to vector<8x128xf32>
    %13 = arith.mulf %10, %12 : vector<8x128xf32>
    %c0_5 = arith.constant 0 : index
    %c0_6 = arith.constant 0 : index
    %14 = vector.load %arg3[%c0_5, %c0_6] : memref<8x128xf32, #tpu.memory_space<vmem>>, vector<8x128xf32>
    tpu.vector_store %arg3[%c0_5, %c0_6], %13 {strides = array<i32>} : memref<8x128xf32, #tpu.memory_space<vmem>>, vector<8x128xf32>,
    return
  }
  func.func @transform_0(%arg0: i32) -> (i32, i32) {
    %c0_i32 = arith.constant 0 : i32
    %c0_i32_0 = arith.constant 0 : i32
    return %arg0, %c0_i32 : i32, i32
  }
  func.func @transform_1(%arg0: i32) -> (i32, i32) {
    %c0_i32 = arith.constant 0 : i32
    %c0_i32_0 = arith.constant 0 : i32
    %c0_i32_1 = arith.constant 0 : i32
    return %c0_i32, %c0_i32_0 : i32, i32
  }
  func.func @transform_2(%arg0: i32) -> (i32, i32) {
    %c0_i32 = arith.constant 0 : i32
    %c0_i32_0 = arith.constant 0 : i32
    return %arg0, %c0_i32 : i32, i32
  }
}

</mosaic_0001>

<llo_original>
// kernel: tpu_custom_call.1
$region0: #{tpu_custom_call.1}
  #allocation0 [shape = 'u32[]', space=smem, size = 0x4, offset = 0x4, fixed_abs, tag = 'smem constant byte address 0x4 - core index']
  #allocation1 [shape = 'u32[72,128]{1,0:T(1,128)}', space=vmem, size = 0x9000, scoped, tag = 'internal scratch']
  %s0 = inlined_call_operand.hbm [shape: f32[16,128], index: 0, kind: input, shape index: {}]
  %s1 = inlined_call_operand.hbm [shape: f32[1,128], index: 1, kind: input, shape index: {}]
  %s2 = inlined_call_operand.hbm [shape: f32[16,128], index: 2, kind: output, shape index: {}]
  %s3 = sld [smem:[#allocation0]]
  $region49: #{tpu_custom_call.1} parent=0
    _
  %s5 = ssub.s32 1, %s3
  %s6 = scalar_select 0, %s5, %s3
  $region1: #{tpu_custom_call.1} parent=0
    #allocation2 [shape = 'u8[8192]{0}', space=vmem, size = 0x2000, scoped, tag = 'input window, operand 0']
    #allocation3 [shape = 's32[2]{0}', space=sflag, size = 0x8, scoped, tag = 'scoped memory for tpu_custom_call.1']
    #allocation4 [shape = 's32[2]{0}', space=sflag, size = 0x8, scoped, tag = 'scoped memory for tpu_custom_call.1']
    #allocation5 [shape = 'u8[512]{0}', space=vmem, size = 0x400, scoped, tag = 'input window, operand 1, single buffered']
    #allocation6 [shape = 's32[1]{0}', space=sflag, size = 0x4, scoped, tag = 'scoped memory for tpu_custom_call.1']
    #allocation7 [shape = 'u8[8192]{0}', space=vmem, size = 0x2000, scoped, tag = 'output window, operand 0']
    %7 = vsyncpa [#allocation3], 0
    %s8 = scalar_lea.sflag [#allocation3], 1
    %9 = vsyncpa %s8, 0
    %10 = vsyncpa [#allocation6], 0
    %11 = vsyncpa [#allocation4], 0
    %s12 = scalar_lea.sflag [#allocation4], 1
    %13 = vsyncpa %s12, 0
    loop: start=0, step=1, limit=4
    $region2: #{tpu_custom_call.1} parent=1 // loop_pre_header
      _
    $region3: #{tpu_custom_call.1} parent=1 // loop_header
      %s15 = sphi 0, %s19
      %p16 = scmp.ge.s32.totalorder %s15, 4
      %s25 = sphi 0, %s27
      %s28 = sphi 0, %s25
      %s29 = sphi 0, %s28
      %s45 = sphi 0, %s29
      %s49 = sphi 0, %s49
      %s51 = sphi 0, %s49
      %s52 = sphi 0, %s51
      %s66 = sphi 0, %s52
      %s72 = sphi 0, %s74
      %s75 = sphi 0, %s72
      %s76 = sphi 0, %s75
      %s92 = sphi 0, %s76
    $region4: #{tpu_custom_call.1} parent=1 // loop_header_branch
      %18 = sbr.rel (%p16) target = $region8
    $region5: #{tpu_custom_call.1} parent=1 // loop_body
      %s20 = ssub.s32 %s15, 1
      %s21 = ssub.s32 %s15, 2
      %s22 = sadd.s32 %s15, 1
      %s23 = ssub.s32 %s15, %s22
      %p24 = scmp.eq.s32.totalorder %s23, 0
      %s26 = sadd.s32 %s25, 1
      %s27 = scalar_select %p24, %s25, %s26
      %p30 = pneg %p24
      %p31 = scmp.eq.s32.totalorder %s15, 1
      %p32 = por %p30, %p31
      %p33 = scmp.ne.s32.totalorder %s25, %s28
      %p34 = scmp.eq.s32.totalorder %s15, 0
      %p35 = por %p33, %p34
      %p36 = scmp.ne.s32.totalorder %s25, %s28
      %p37 = scmp.eq.s32.totalorder %s20, 1
      %p38 = por %p36, %p37
      %p39 = scmp.ne.s32.totalorder %s28, %s29
      %p40 = scmp.eq.s32.totalorder %s20, 0
      %p41 = por %p39, %p40
      %p42 = scmp.ne.s32.totalorder %s28, %s29
      %p43 = scmp.eq.s32.totalorder %s21, 1
      %p44 = por %p42, %p43
      %p46 = scmp.ne.s32.totalorder %s29, %s45
      %p47 = scmp.eq.s32.totalorder %s21, 0
      %p48 = por %p46, %p47
      %s50 = sadd.s32 %s49, 1
      %p53 = scmp.eq.s32.totalorder %s15, 1
      %p54 = scmp.ne.s32.totalorder %s49, %s51
      %p55 = scmp.eq.s32.totalorder %s15, 0
      %p56 = por %p54, %p55
      %p57 = scmp.ne.s32.totalorder %s49, %s51
      %p58 = scmp.eq.s32.totalorder %s20, 1
      %p59 = por %p57, %p58
      %p60 = scmp.ne.s32.totalorder %s51, %s52
      %p61 = scmp.eq.s32.totalorder %s20, 0
      %p62 = por %p60, %p61
      %p63 = scmp.ne.s32.totalorder %s51, %s52
      %p64 = scmp.eq.s32.totalorder %s21, 1
      %p65 = por %p63, %p64
      %p67 = scmp.ne.s32.totalorder %s52, %s66
      %p68 = scmp.eq.s32.totalorder %s21, 0
      %p69 = por %p67, %p68
      %s70 = ssub.s32 %s15, %s22
      %p71 = scmp.eq.s32.totalorder %s70, 0
      %s73 = sadd.s32 %s72, 1
      %s74 = scalar_select %p71, %s72, %s73
      %p77 = pneg %p71
      %p78 = scmp.eq.s32.totalorder %s15, 1
      %p79 = por %p77, %p78
      %p80 = scmp.ne.s32.totalorder %s72, %s75
      %p81 = scmp.eq.s32.totalorder %s15, 0
      %p82 = por %p80, %p81
      %p83 = scmp.ne.s32.totalorder %s72, %s75
      %p84 = scmp.eq.s32.totalorder %s20, 1
      %p85 = por %p83, %p84
      %p86 = scmp.ne.s32.totalorder %s75, %s76
      %p87 = scmp.eq.s32.totalorder %s20, 0
      %p88 = por %p86, %p87
      %p89 = scmp.ne.s32.totalorder %s75, %s76
      %p90 = scmp.eq.s32.totalorder %s21, 1
      %p91 = por %p89, %p90
      %p93 = scmp.ne.s32.totalorder %s76, %s92
      %p94 = scmp.eq.s32.totalorder %s21, 0
      %p95 = por %p93, %p94
      %p96 = scmp.le.s32.totalorder 1, %s15
      %p97 = scmp.lt.s32.totalorder %s15, 3
      %p98 = pnand %p96, %p97
      %p99 = pneg %p98
      // Predicated region
      $region9: #{tpu_custom_call.1} parent=5 // pred_check
        _
      $region10: #{tpu_custom_call.1} parent=5 // pred_check_branch
        %101 = sbr.rel (%p98) target = $region12
      $region11: #{tpu_custom_call.1} parent=5 // pred_region
        %s102 = ssub.s32 %s15, 1
        // Predicated region
        $region13: #{tpu_custom_call.1} parent=11 // pred_check
          %p103 = pneg %p62
        $region14: #{tpu_custom_call.1} parent=11 // pred_check_branch
          %105 = sbr.rel (%p103) target = $region16
        $region15: #{tpu_custom_call.1} parent=11 // pred_region
          %107 = vsyncadd [#allocation6], 0
          %s109 = sshll.u32 %s1, 4
          %s110 = int_to_ptr.hbm [resolvable:$true] %s109
          %s111 = sshll.u32 [#allocation5], 4
          %s112 = int_to_ptr.vmem [resolvable:$true] %s111
          %114 = dma.hbm_to_vmem [thread:$0]  %s110, 16, %s112, [#allocation6]
        $region16: #{tpu_custom_call.1} parent=11 // pred_fallthru
          _
      $region12: #{tpu_custom_call.1} parent=5 // pred_fallthru
        _
      %p115 = scmp.lt.s32.totalorder %s15, 2
      // Predicated region
      $region17: #{tpu_custom_call.1} parent=5 // pred_check
        %p116 = pneg %p115
      $region18: #{tpu_custom_call.1} parent=5 // pred_check_branch
        %118 = sbr.rel (%p116) target = $region20
      $region19: #{tpu_custom_call.1} parent=5 // pred_region
        // Predicated region
        $region21: #{tpu_custom_call.1} parent=19 // pred_check
          %p119 = pneg %p35
        $region22: #{tpu_custom_call.1} parent=19 // pred_check_branch
          %121 = sbr.rel (%p119) target = $region24
        $region23: #{tpu_custom_call.1} parent=19 // pred_region
          %s122 = sand.u32 %s25, 1
          %s123 = scalar_lea.sflag [#allocation3], %s122
          %s124 = sand.u32 %s25, 1
          %s125 = smul.addr %s124, 8
          %s126 = scalar_lea.vmem [#allocation2], %s125
          %128 = vsyncadd %s123, 0
          %s129 = smul.addr %s15, 8
          %s130 = scalar_lea.hbm %s0, %s129
          %s132 = sshll.u32 %s130, 4
          %s133 = int_to_ptr.hbm [resolvable:$true] %s132
          %s134 = sshll.u32 %s126, 4
          %s135 = int_to_ptr.vmem [resolvable:$true] %s134
          %137 = dma.hbm_to_vmem [thread:$0]  %s133, 128, %s135, %s123
        $region24: #{tpu_custom_call.1} parent=19 // pred_fallthru
          _
      $region20: #{tpu_custom_call.1} parent=5 // pred_fallthru
        _
      %p138 = scmp.le.s32.totalorder 1, %s15
      %p139 = scmp.lt.s32.totalorder %s15, 3
      %p140 = pnand %p138, %p139
      %p141 = pneg %p140
      // Predicated region
      $region25: #{tpu_custom_call.1} parent=5 // pred_check
        _
      $region26: #{tpu_custom_call.1} parent=5 // pred_check_branch
        %143 = sbr.rel (%p140) target = $region28
      $region27: #{tpu_custom_call.1} parent=5 // pred_region
        %s144 = ssub.s32 %s15, 1
        %s145 = sand.u32 %s28, 1
        %s146 = scalar_lea.sflag [#allocation3], %s145
        %s147 = sand.u32 %s28, 1
        %s148 = smul.addr %s147, 8
        %s149 = scalar_lea.vmem [#allocation2], %s148
        // Predicated region
        $region29: #{tpu_custom_call.1} parent=27 // pred_check
          %p150 = pneg %p41
        $region30: #{tpu_custom_call.1} parent=27 // pred_check_branch
          %152 = sbr.rel (%p150) target = $region32
        $region31: #{tpu_custom_call.1} parent=27 // pred_region
          %154 = dma.done %s146, 128
        $region32: #{tpu_custom_call.1} parent=27 // pred_fallthru
          _
        // Predicated region
        $region33: #{tpu_custom_call.1} parent=27 // pred_check
          %p155 = pneg %p62
        $region34: #{tpu_custom_call.1} parent=27 // pred_check_branch
          %157 = sbr.rel (%p155) target = $region36
        $region35: #{tpu_custom_call.1} parent=27 // pred_region
          %159 = dma.done [#allocation6], 16
        $region36: #{tpu_custom_call.1} parent=27 // pred_fallthru
          _
        %s160 = sand.u32 %s28, 1
        %s161 = scalar_lea.sflag [#allocation3], %s160
        %s162 = sand.u32 %s28, 1
        %s163 = smul.addr %s162, 8
        %s164 = scalar_lea.vmem [#allocation2], %s163
        %p165 = pneg %p41
        %p166 = pneg %p38
        %p167 = pneg %p62
        %p168 = pneg %p59
        %p169 = pneg %p88
        %p170 = pneg %p85
        %s171 = sand.u32 %s75, 1
        %s172 = scalar_lea.sflag [#allocation4], %s171
        %s173 = sand.u32 %s75, 1
        %s174 = smul.addr %s173, 8
        %s175 = scalar_lea.vmem [#allocation7], %s174
        %v176 = vld [vmem:[%s149] sm:$0xff]
        %v177 = vmul.f32 %v176, %v176
        %178 = vadd.xlane.f32.xlu0 %v177
        %v179 = vpop.xlane.xlu0 %178
        %v180 = vrcp.pop 128.0
        %v181 = vmul.f32 128.0, %v180
        %v182 = vsub.f32 1.0, %v181
        %v183 = vmul.f32 %v180, %v182
        %v184 = vadd.f32 %v180, %v183
        %vm185 = vweird.f32 %v180
        %v186 = vsel %vm185, %v180, %v184
        %v187 = vmul.f32 %v179, %v186
        %v188 = vadd.f32 %v187, 1e-05
        %v189 = vrsqrt.pop %v188
        %v190 = vmul.f32 %v189, %v188
        %v191 = vmul.f32 %v190, %v189
        %v192 = vmul.f32 0.5, %v191
        %v193 = vsub.f32 1.5, %v192
        %v194 = vmul.f32 %v189, %v193
        %vm195 = vweird.f32 %v188
        %vm196 = vweird.f32 %v189
        %vm197 = vmor %vm195, %vm196
        %v198 = vsel %vm197, %v189, %v194
        %v199 = vmul.f32 %v176, %v198
        %v200 = vld [vmem:[#allocation5] sm:$0x1]
        %v202 = vperm.slane %v200, 0
        %v204 = vmul.f32 %v199, %v202
        %205 = vst [vmem:[%s175] sm:$0xff] %v204
        %s206 = sand.u32 %s75, 1
        %s207 = scalar_lea.sflag [#allocation4], %s206
        %s208 = sand.u32 %s75, 1
        %s209 = smul.addr %s208, 8
        %s210 = scalar_lea.vmem [#allocation7], %s209
        // Predicated region
        $region37: #{tpu_custom_call.1} parent=27 // pred_check
          %p211 = pneg %p85
        $region38: #{tpu_custom_call.1} parent=27 // pred_check_branch
          %213 = sbr.rel (%p211) target = $region40
        $region39: #{tpu_custom_call.1} parent=27 // pred_region
          %215 = vsyncadd %s207, 0
          %s216 = smul.addr %s20, 8
          %s217 = scalar_lea.hbm %s2, %s216
          %s219 = sshll.u32 %s210, 4
          %s220 = int_to_ptr.vmem [resolvable:$true] %s219
          %s221 = sshll.u32 %s217, 4
          %s222 = int_to_ptr.hbm [resolvable:$true] %s221
          %224 = dma.vmem_to_hbm [thread:$0]  %s220, 128, %s222, %s207
        $region40: #{tpu_custom_call.1} parent=27 // pred_fallthru
          _
      $region28: #{tpu_custom_call.1} parent=5 // pred_fallthru
        _
      %p225 = scmp.le.s32.totalorder 2, %s15
      // Predicated region
      $region41: #{tpu_custom_call.1} parent=5 // pred_check
        %p226 = pneg %p225
      $region42: #{tpu_custom_call.1} parent=5 // pred_check_branch
        %228 = sbr.rel (%p226) target = $region44
      $region43: #{tpu_custom_call.1} parent=5 // pred_region
        %s229 = ssub.s32 %s15, 2
        // Predicated region
        $region45: #{tpu_custom_call.1} parent=43 // pred_check
          %p230 = pneg %p91
        $region46: #{tpu_custom_call.1} parent=43 // pred_check_branch
          %232 = sbr.rel (%p230) target = $region48
        $region47: #{tpu_custom_call.1} parent=43 // pred_region
          %s233 = sand.u32 %s76, 1
          %s234 = scalar_lea.sflag [#allocation4], %s233
          %s235 = sand.u32 %s76, 1
          %s236 = smul.addr %s235, 8
          %s237 = scalar_lea.vmem [#allocation7], %s236
          %239 = dma.done %s234, 128
        $region48: #{tpu_custom_call.1} parent=43 // pred_fallthru
          _
      $region44: #{tpu_custom_call.1} parent=5 // pred_fallthru
        _
    $region6: #{tpu_custom_call.1} parent=1 // loop_footer
      %s19 = sadd.s32 1, %s15
    $region7: #{tpu_custom_call.1} parent=1 // loop_footer_branch
      %14 = sbr.rel target = $region3
    $region8: #{tpu_custom_call.1} parent=1 // loop_exit
      _
    %240 = vsyncpa [#allocation3], 1
    %s241 = scalar_lea.sflag [#allocation3], 1
    %242 = vsyncpa %s241, 1
    %243 = vsyncpa [#allocation6], 1
    %244 = vsyncpa [#allocation4], 1
    %s245 = scalar_lea.sflag [#allocation4], 1
    %246 = vsyncpa %s245, 1

</llo_original>
